<compile_context>
chip_gen: v7x
topology: tpu7x:2x2x1
jax: 0.10.0
libtpu: 0.0.40
codegen_flags: <defaults>
</compile_context>

<pallas_src>
import jax
import jax.numpy as jnp
import numpy as np
from jax.experimental import pallas as pl
from jax.experimental.pallas import tpu as pltpu


def _lovasz_smooth_kernel(err_ref, gt_ref, gts_ref, tri_ref, out_ref, carry_ref):
    """One (nb, tk) chunk of the per-image smooth Lovasz hinge.

    err_ref : (nb, tk) f32   hinge errors, globally sorted descending per row.
    gt_ref  : (nb, tk) bf16  labels permuted by the same per-row order ({0,1}).
    gts_ref : (nb, 128) f32  total positives per image (broadcast across lanes).
    tri_ref : (tk, tk) bf16  upper-triangular ones (inclusive-cumsum operator).
    out_ref : (nb, 128) f32  per-image partial sums (accumulated across chunks).
    carry_ref: (nb, 128) f32 scratch; lane 0 = running gt cumsum, lane 1 = last
               jaccard value of the previous chunk.
    """
    k = pl.program_id(1)
    nb, tk = err_ref.shape

    @pl.when(k == 0)
    def _init():
        carry_ref[...] = jnp.zeros_like(carry_ref)
        out_ref[...] = jnp.zeros_like(out_ref)

    err = err_ref[...]
    gt = gt_ref[...]                      # bf16, exactly {0, 1}
    gts = gts_ref[:, 0:1]                 # (nb, 1)

    # Inclusive within-chunk cumsum on the MXU (bf16 operands, f32 accumulate —
    # bit-exact since operands are {0,1}), plus the carried sum of prior chunks.
    cum_local = jnp.dot(gt, tri_ref[...], preferred_element_type=jnp.float32)
    cum_prev = carry_ref[:, 0:1]
    cum_gt = cum_prev + cum_local         # global inclusive cumsum of gt

    lane = jax.lax.broadcasted_iota(jnp.int32, (nb, tk), 1)
    pos = (lane + 1 + k * tk).astype(jnp.float32)   # global 1-based position

    intersection = gts - cum_gt
    union = gts + pos - cum_gt            # >= 1 always, no div-by-zero
    jaccard = 1.0 - intersection / union

    # lovasz_grad = first difference along the globally sorted pixel axis.
    # Lane 0 of this chunk needs the previous chunk's last jaccard (0 at k==0).
    jac_prev = carry_ref[:, 1:2]
    rolled = pltpu.roll(jaccard, shift=1, axis=1)
    shifted = jnp.where(lane == 0, jac_prev, rolled)
    grad = jaccard - shifted

    # "smooth" hinge: F.elu(err) + 1; clamp before exp so the dead branch stays finite.
    smooth = jnp.where(err > 0.0, err + 1.0, jnp.exp(jnp.minimum(err, 0.0)))

    contrib = smooth * grad               # (nb, tk)
    # Fold the tk lanes into a lane-dense (nb, 128) partial sum (vreg-aligned slices).
    partial = contrib[:, 0:128]
    for j in range(1, tk // 128):
        partial = partial + contrib[:, j * 128:(j + 1) * 128]
    out_ref[...] += partial

    # Update carries for the next chunk of this image block.
    carry_ref[:, 0:1] = cum_gt[:, tk - 1:tk]
    carry_ref[:, 1:2] = jaccard[:, tk - 1:tk]


def smooth_lovasz_with_logits_loss(prediction, target, *, block_pixels=256):
    """Forward of SmoothLovaszWithLogitsLoss: lovasz_hinge_smooth(per_image=True)."""
    n = prediction.shape[0]
    logits = prediction.reshape(n, -1).astype(jnp.float32)
    labels = target.reshape(n, -1).astype(jnp.float32)
    p = logits.shape[1]

    signs = 2.0 * labels - 1.0
    errors = 1.0 - logits * signs

    # Per-image descending sort of errors, carrying the labels, as ONE multi-operand
    # sort (no argsort + gathers).
    # TODO(synk): sort has no Pallas TPU primitive; done in XLA glue.
    neg_sorted, gt_sorted = jax.lax.sort((-errors, labels), dimension=1, num_keys=1)
    errors_sorted = -neg_sorted

    tk = block_pixels                     # pixel chunk (lane) width, multiple of 128
    nb = 8                                # sublane block over the batch axis

    # Pad pixels to a multiple of tk (appended AFTER the sort: err=-1e9, gt=0 keep the
    # rows descending and contribute exactly 0) and batch to a multiple of 8 sublanes
    # (padded images also contribute exactly 0).
    p_pad = ((p + tk - 1) // tk) * tk
    n_pad = ((n + nb - 1) // nb) * nb

    err_p = jnp.full((n_pad, p_pad), -1e9, jnp.float32).at[:n, :p].set(errors_sorted)
    gt_p = jnp.zeros((n_pad, p_pad), jnp.float32).at[:n, :p].set(gt_sorted)

    gts = jnp.sum(gt_p, axis=1, keepdims=True)                        # (n_pad, 1)
    gts_b = jnp.broadcast_to(gts, (n_pad, 128)).astype(jnp.float32)   # lane-dense

    gt_bf = gt_p.astype(jnp.bfloat16)     # lossless: values are exactly {0, 1}

    # tk x tk inclusive-cumsum operator (upper-triangular ones), bf16.
    row = jax.lax.broadcasted_iota(jnp.int32, (tk, tk), 0)
    col = jax.lax.broadcasted_iota(jnp.int32, (tk, tk), 1)
    tri = (row <= col).astype(jnp.bfloat16)

    grid = (n_pad // nb, p_pad // tk)

    # Working set: double-buffered err/gt/gts/tri/out blocks + carry scratch.
    vmem_bytes = (2 * nb * tk * 4 + 2 * nb * tk * 2 + 2 * nb * 128 * 4
                  + 2 * tk * tk * 2 + 2 * nb * 128 * 4 + nb * 128 * 4)
    vmem_limit = int(min(max(4 * vmem_bytes + (2 << 20), 8 << 20), 64 << 20))

    out = pl.pallas_call(
        _lovasz_smooth_kernel,
        out_shape=jax.ShapeDtypeStruct((n_pad, 128), jnp.float32),
        grid_spec=pltpu.PrefetchScalarGridSpec(
            num_scalar_prefetch=0,
            grid=grid,
            in_specs=[
                pl.BlockSpec((nb, tk), lambda i, k: (i, k)),    # errors (f32)
                pl.BlockSpec((nb, tk), lambda i, k: (i, k)),    # labels (bf16)
                pl.BlockSpec((nb, 128), lambda i, k: (i, 0)),   # per-image totals
                pl.BlockSpec((tk, tk), lambda i, k: (0, 0)),    # tri (fetched once)
            ],
            out_specs=pl.BlockSpec((nb, 128), lambda i, k: (i, 0)),
            scratch_shapes=[pltpu.VMEM((nb, 128), jnp.float32)],
        ),
        compiler_params=pltpu.CompilerParams(
            dimension_semantics=("parallel", "arbitrary"),
            vmem_limit_bytes=vmem_limit,
        ),
    )(err_p, gt_bf, gts_b, tri)

    # out[i] holds per-image partial sums spread across 128 lanes; padded rows are 0.
    return jnp.sum(out[:n]) / float(n)


def _reference_loss(prediction, target):
    """Pure-JAX reference of lovasz_hinge_smooth(per_image=True)."""
    n = prediction.shape[0]
    logits = prediction.reshape(n, -1).astype(jnp.float32)
    labels = target.reshape(n, -1).astype(jnp.float32)
    signs = 2.0 * labels - 1.0
    errors = 1.0 - logits * signs
    order = jnp.argsort(-errors, axis=1)
    errs = jnp.take_along_axis(errors, order, axis=1)
    gts = jnp.take_along_axis(labels, order, axis=1)
    gsum = gts.sum(axis=1, keepdims=True)
    inter = gsum - jnp.cumsum(gts, axis=1)
    union = gsum + jnp.cumsum(1.0 - gts, axis=1)
    jac = 1.0 - inter / union
    grad = jnp.concatenate([jac[:, :1], jac[:, 1:] - jac[:, :-1]], axis=1)
    smooth = jnp.where(errs > 0.0, errs + 1.0, jnp.exp(errs))
    return jnp.mean(jnp.sum(smooth * grad, axis=1))


if __name__ == "__main__":
    key = jax.random.PRNGKey(0)
    k1, k2 = jax.random.split(key)
    # prediction: logits, target: binary mask — NCHW. P = 1*16*32 = 512 pixels so the
    # default tk=256 gives 2 pixel chunks and exercises the cross-chunk carry path.
    prediction = jax.random.normal(k1, (2, 1, 16, 32), dtype=jnp.float32)
    target = (jax.random.uniform(k2, (2, 1, 16, 32)) > 0.5).astype(jnp.float32)

    loss_fn = jax.jit(lambda p, t: smooth_lovasz_with_logits_loss(p, t))
    loss = jax.block_until_ready(loss_fn(prediction, target))
    ref = jax.block_until_ready(_reference_loss(prediction, target))

    if not np.allclose(np.asarray(loss), np.asarray(ref), rtol=1e-4, atol=1e-4):
        raise AssertionError(f"mismatch: pallas={loss} ref={ref}")
    print("KERNEL_OK")
</pallas_src>

<mosaic_0001>
module attributes {stable_mosaic.version = 11 : i64} {
  func.func @_lovasz_smooth_kernel(%arg0: i32, %arg1: i32, %arg2: memref<8x256xf32, #tpu.memory_space<vmem>>, %arg3: memref<8x256xbf16, #tpu.memory_space<vmem>>, %arg4: memref<8x128xf32, #tpu.memory_space<vmem>>, %arg5: memref<256x256xbf16, #tpu.memory_space<vmem>>, %arg6: memref<8x128xf32, #tpu.memory_space<vmem>>, %arg7: memref<8x128xf32, #tpu.memory_space<vmem>>) attributes {dimension_semantics = [#tpu.dimension_semantics<parallel>, #tpu.dimension_semantics<arbitrary>], iteration_bounds = array<i64: 1, 2>, scalar_prefetch = 0 : i64, scratch_operands = 1 : i64, tpu.core_type = #tpu.core_type<tc>, window_params = [{transform_indices = @transform_0, window_bounds = array<i64: 8, 256>}, {transform_indices = @transform_1, window_bounds = array<i64: 8, 256>}, {transform_indices = @transform_2, window_bounds = array<i64: 8, 128>}, {pipeline_mode = #tpu.pipeline_mode<synchronous>, transform_indices = @transform_3, window_bounds = array<i64: 256, 256>}, {transform_indices = @transform_4, window_bounds = array<i64: 8, 128>}]} {
    %c0_i32 = arith.constant 0 : i32
    %0 = arith.cmpi eq, %arg1, %c0_i32 : i32
    %1 = arith.extui %0 : i1 to i32
    %c0_i32_0 = arith.constant 0 : i32
    %2 = arith.cmpi ne, %1, %c0_i32_0 : i32
    scf.if %2 {
      %cst_25 = arith.constant 0.000000e+00 : f32
      %53 = vector.broadcast %cst_25 : f32 to vector<8x128xf32>
      %c0_26 = arith.constant 0 : index
      %c0_27 = arith.constant 0 : index
      %54 = vector.load %arg7[%c0_26, %c0_27] : memref<8x128xf32, #tpu.memory_space<vmem>>, vector<8x128xf32>
      tpu.vector_store %arg7[%c0_26, %c0_27], %53 {strides = array<i32>} : memref<8x128xf32, #tpu.memory_space<vmem>>, vector<8x128xf32>,
      %cst_28 = arith.constant 0.000000e+00 : f32
      %55 = vector.broadcast %cst_28 : f32 to vector<8x128xf32>
      %c0_29 = arith.constant 0 : index
      %c0_30 = arith.constant 0 : index
      %56 = vector.load %arg6[%c0_29, %c0_30] : memref<8x128xf32, #tpu.memory_space<vmem>>, vector<8x128xf32>
      tpu.vector_store %arg6[%c0_29, %c0_30], %55 {strides = array<i32>} : memref<8x128xf32, #tpu.memory_space<vmem>>, vector<8x128xf32>,
    } else {
    }
    %c0 = arith.constant 0 : index
    %c0_1 = arith.constant 0 : index
    %3 = vector.load %arg2[%c0, %c0_1] : memref<8x256xf32, #tpu.memory_space<vmem>>, vector<8x256xf32>
    %c0_2 = arith.constant 0 : index
    %c0_3 = arith.constant 0 : index
    %4 = vector.load %arg3[%c0_2, %c0_3] : memref<8x256xbf16, #tpu.memory_space<vmem>>, vector<8x256xbf16>
    %c0_4 = arith.constant 0 : index
    %c0_5 = arith.constant 0 : index
    %5 = vector.load %arg4[%c0_4, %c0_5] : memref<8x128xf32, #tpu.memory_space<vmem>>, vector<8x1xf32>
    %c0_6 = arith.constant 0 : index
    %c0_7 = arith.constant 0 : index
    %6 = vector.load %arg5[%c0_6, %c0_7] : memref<256x256xbf16, #tpu.memory_space<vmem>>, vector<256x256xbf16>
    %cst = arith.constant dense<0.000000e+00> : vector<8x256xf32>
    %7 = tpu.matmul %4, %6, %cst {dimension_numbers = #tpu.dot_dimension_numbers<[1], [0], [0], [1], [0, 0, 1, 1], [], []>} : vector<8x256xbf16>, vector<256x256xbf16>, vector<8x256xf32> -> vector<8x256xf32>
    %c0_8 = arith.constant 0 : index
    %c0_9 = arith.constant 0 : index
    %8 = vector.load %arg7[%c0_8, %c0_9] : memref<8x128xf32, #tpu.memory_space<vmem>>, vector<8x1xf32>
    %9 = vector.broadcast %8 : vector<8x1xf32> to vector<8x256xf32>
    %10 = arith.addf %9, %7 : vector<8x256xf32>
    %11 = tpu.iota {dimensions = array<i32: 1>} : vector<8x256xi32>
    %c1_i32 = arith.constant 1 : i32
    %12 = vector.broadcast %c1_i32 : i32 to vector<8x256xi32>
    %13 = arith.addi %11, %12 : vector<8x256xi32>
    %c256_i32 = arith.constant 256 : i32
    %14 = arith.muli %arg1, %c256_i32 : i32
    %15 = vector.broadcast %14 : i32 to vector<8x256xi32>
    %16 = arith.addi %13, %15 : vector<8x256xi32>
    %17 = arith.sitofp %16 : vector<8x256xi32> to vector<8x256xf32>
    %18 = vector.broadcast %5 : vector<8x1xf32> to vector<8x256xf32>
    %19 = arith.subf %18, %10 : vector<8x256xf32>
    %20 = vector.broadcast %5 : vector<8x1xf32> to vector<8x256xf32>
    %21 = arith.addf %20, %17 : vector<8x256xf32>
    %22 = arith.subf %21, %10 : vector<8x256xf32>
    %23 = arith.divf %19, %22 : vector<8x256xf32>
    %cst_10 = arith.constant 1.000000e+00 : f32
    %24 = vector.broadcast %cst_10 : f32 to vector<8x256xf32>
    %25 = arith.subf %24, %23 : vector<8x256xf32>
    %c0_11 = arith.constant 0 : index
    %c1 = arith.constant 1 : index
    %26 = vector.load %arg7[%c0_11, %c1] : memref<8x128xf32, #tpu.memory_space<vmem>>, vector<8x1xf32>
    %c1_i32_12 = arith.constant 1 : i32
    %27 = tpu.dynamic_rotate %25 by %c1_i32_12 dim 1 : vector<8x256xf32>, i32 -> vector<8x256xf32>
    %c0_i32_13 = arith.constant 0 : i32
    %28 = vector.broadcast %c0_i32_13 : i32 to vector<8x256xi32>
    %29 = arith.cmpi eq, %11, %28 : vector<8x256xi32>
    %30 = vector.shape_cast %26 : vector<8x1xf32> to vector<8x1xf32>
    %31 = vector.broadcast %30 : vector<8x1xf32> to vector<8x256xf32>
    %32 = arith.select %29, %31, %27 : vector<8x256xi1>, vector<8x256xf32>
    %33 = arith.subf %25, %32 : vector<8x256xf32>
    %cst_14 = arith.constant 0.000000e+00 : f32
    %34 = vector.broadcast %cst_14 : f32 to vector<8x256xf32>
    %35 = arith.cmpf ogt, %3, %34 : vector<8x256xf32>
    %cst_15 = arith.constant 1.000000e+00 : f32
    %36 = vector.broadcast %cst_15 : f32 to vector<8x256xf32>
    %37 = arith.addf %3, %36 : vector<8x256xf32>
    %cst_16 = arith.constant 0.000000e+00 : f32
    %38 = vector.broadcast %cst_16 : f32 to vector<8x256xf32>
    %39 = arith.minimumf %3, %38 : vector<8x256xf32>
    %40 = math.exp %39 : vector<8x256xf32>
    %41 = arith.select %35, %37, %40 : vector<8x256xi1>, vector<8x256xf32>
    %42 = arith.mulf %41, %33 : vector<8x256xf32>
    %43 = vector.extract_strided_slice %42 {offsets = [0, 0], sizes = [8, 128], strides = [1, 1]} : vector<8x256xf32> to vector<8x128xf32>
    %44 = vector.extract_strided_slice %42 {offsets = [0, 128], sizes = [8, 128], strides = [1, 1]} : vector<8x256xf32> to vector<8x128xf32>
    %45 = arith.addf %43, %44 : vector<8x128xf32>
    %c0_17 = arith.constant 0 : index
    %c0_18 = arith.constant 0 : index
    %46 = vector.load %arg6[%c0_17, %c0_18] : memref<8x128xf32, #tpu.memory_space<vmem>>, vector<8x128xf32>
    %47 = arith.addf %46, %45 : vector<8x128xf32>
    %c0_19 = arith.constant 0 : index
    %c0_20 = arith.constant 0 : index
    %48 = vector.load %arg6[%c0_19, %c0_20] : memref<8x128xf32, #tpu.memory_space<vmem>>, vector<8x128xf32>
    tpu.vector_store %arg6[%c0_19, %c0_20], %47 {strides = array<i32>} : memref<8x128xf32, #tpu.memory_space<vmem>>, vector<8x128xf32>,
    %49 = vector.extract_strided_slice %10 {offsets = [0, 255], sizes = [8, 1], strides = [1, 1]} : vector<8x256xf32> to vector<8x1xf32>
    %c0_21 = arith.constant 0 : index
    %c0_22 = arith.constant 0 : index
    %50 = vector.load %arg7[%c0_21, %c0_22] : memref<8x128xf32, #tpu.memory_space<vmem>>, vector<8x1xf32>
    tpu.vector_store %arg7[%c0_21, %c0_22], %49 {strides = array<i32>} : memref<8x128xf32, #tpu.memory_space<vmem>>, vector<8x1xf32>,
    %51 = vector.extract_strided_slice %25 {offsets = [0, 255], sizes = [8, 1], strides = [1, 1]} : vector<8x256xf32> to vector<8x1xf32>
    %c0_23 = arith.constant 0 : index
    %c1_24 = arith.constant 1 : index
    %52 = vector.load %arg7[%c0_23, %c1_24] : memref<8x128xf32, #tpu.memory_space<vmem>>, vector<8x1xf32>
    tpu.vector_store %arg7[%c0_23, %c1_24], %51 {strides = array<i32>} : memref<8x128xf32, #tpu.memory_space<vmem>>, vector<8x1xf32>,
    return
  }
  func.func @transform_0(%arg0: i32, %arg1: i32) -> (i32, i32) {
    %c0_i32 = arith.constant 0 : i32
    return %arg0, %arg1 : i32, i32
  }
  func.func @transform_1(%arg0: i32, %arg1: i32) -> (i32, i32) {
    %c0_i32 = arith.constant 0 : i32
    return %arg0, %arg1 : i32, i32
  }
  func.func @transform_2(%arg0: i32, %arg1: i32) -> (i32, i32) {
    %c0_i32 = arith.constant 0 : i32
    %c0_i32_0 = arith.constant 0 : i32
    return %arg0, %c0_i32 : i32, i32
  }
  func.func @transform_3(%arg0: i32, %arg1: i32) -> (i32, i32) {
    %c0_i32 = arith.constant 0 : i32
    %c0_i32_0 = arith.constant 0 : i32
    %c0_i32_1 = arith.constant 0 : i32
    return %c0_i32, %c0_i32_0 : i32, i32
  }
  func.func @transform_4(%arg0: i32, %arg1: i32) -> (i32, i32) {
    %c0_i32 = arith.constant 0 : i32
    %c0_i32_0 = arith.constant 0 : i32
    return %arg0, %c0_i32 : i32, i32
  }
}

</mosaic_0001>

<llo_original>
// kernel: neg.3
$region0: #{neg.3}
  #allocation0 [shape = 's32[1]{0}', space=sflag, size = 0x4, scoped, tag = 'scoped memory for neg.3']
  %s0 = inlined_call_operand.vmem [shape: f32[2,512], index: 0, kind: input, shape index: {}]
  %s1 = inlined_call_operand.vmem [shape: f32[2,512], index: 1, kind: output, shape index: {}]
  %v2 = vld [vmem:[%s0] sm:$0x3]
  %3 = xla_tuple %v2
  %4 = xla_tuple %3
  %v5 = vxor.u32 %v2, 2147483648
  %6 = xla_tuple %v5
  %7 = vst [vmem:[%s1] sm:$0x3] %v5
  %s8 = scalar_lea.vmem %s0, 2
  %v9 = vld [vmem:[%s8] sm:$0x3]
  %10 = xla_tuple %v9
  %11 = xla_tuple %10
  %v12 = vxor.u32 %v9, 2147483648
  %13 = xla_tuple %v12
  %s14 = scalar_lea.vmem %s1, 2
  %15 = vst [vmem:[%s14] sm:$0x3] %v12
  %s16 = scalar_lea.vmem %s0, 4
  %v17 = vld [vmem:[%s16] sm:$0x3]
  %18 = xla_tuple %v17
  %19 = xla_tuple %18
  %v20 = vxor.u32 %v17, 2147483648
  %21 = xla_tuple %v20
  %s22 = scalar_lea.vmem %s1, 4
  %23 = vst [vmem:[%s22] sm:$0x3] %v20
  %s24 = scalar_lea.vmem %s0, 6
  %v25 = vld [vmem:[%s24] sm:$0x3]
  %26 = xla_tuple %v25
  %27 = xla_tuple %26
  %v28 = vxor.u32 %v25, 2147483648
  %29 = xla_tuple %v28
  %s30 = scalar_lea.vmem %s1, 6
  %31 = vst [vmem:[%s30] sm:$0x3] %v28

// kernel: _lambda_.1
$region0: #{_lambda_.1}
  #allocation0 [shape = 'u32[]', space=smem, size = 0x4, offset = 0x4, fixed_abs, tag = 'smem constant byte address 0x4 - core index']
  #allocation1 [shape = 'u32[144,128]{1,0:T(1,128)}', space=vmem, size = 0x12000, scoped, tag = 'internal scratch']
  #allocation2 [shape = 'f32[8,128]{1,0:T(8,128)}', space=vmem, size = 0x1000, scoped, tag = 'scratch operand']
  %s0 = inlined_call_operand.vmem [shape: f32[8,512], index: 0, kind: input, shape index: {}]
  %s1 = inlined_call_operand.vmem [shape: bf16[8,512], index: 1, kind: input, shape index: {}]
  %s2 = inlined_call_operand.vmem [shape: f32[8,128], index: 2, kind: input, shape index: {}]
  %s3 = inlined_call_operand.vmem [shape: bf16[256,256], index: 3, kind: input, shape index: {}]
  %s4 = inlined_call_operand.vmem [shape: f32[8,128], index: 4, kind: output, shape index: {}]
  %s5 = sld [smem:[#allocation0]]
  $region53: #{_lambda_.1} parent=0
    _
  %s7 = ssub.s32 1, %s5
  %s8 = scalar_select 0, %s7, %s5
  loop: start=0, step=1, limit=4
  $region2: #{_lambda_.1} parent=0 // loop_pre_header
    _
  $region3: #{_lambda_.1} parent=0 // loop_header
    %s10 = sphi 0, %s14
    %p11 = scmp.ge.s32.totalorder %s10, 4
    %s17 = sphi 0, %s29
    %s18 = sphi 0, %s25
    %s19 = sphi 0, %s17
    %s20 = sphi 0, %s18
    %s21 = sphi 0, %s19
    %s22 = sphi 0, %s20
    %s34 = sphi 0, %s36
    %s37 = sphi 0, %s34
    %s38 = sphi 0, %s37
    %s54 = sphi 0, %s38
    %s62 = sphi 0, %s64
    %s65 = sphi 0, %s62
    %s66 = sphi 0, %s65
    %s82 = sphi 0, %s66
    %s88 = sphi 0, %s90
    %s91 = sphi 0, %s88
    %s92 = sphi 0, %s91
    %s108 = sphi 0, %s92
    %s112 = sphi 0, %s112
    %s114 = sphi 0, %s112
    %s115 = sphi 0, %s114
    %s129 = sphi 0, %s115
    %s135 = sphi 0, %s137
    %s138 = sphi 0, %s135
    %s139 = sphi 0, %s138
    %s155 = sphi 0, %s139
  $region4: #{_lambda_.1} parent=0 // loop_header_branch
    %13 = sbr.rel (%p11) target = $region8
  $region5: #{_lambda_.1} parent=0 // loop_body
    %s15 = ssub.s32 %s10, 1
    %s16 = ssub.s32 %s10, 2
    %s23 = sadd.s32 1, %s18
    %p24 = scmp.ge.s32.totalorder %s23, 2
    %s25 = scalar_select %p24, 0, %s23
    %s26 = sadd.s32 1, %s17
    %s27 = scalar_select %p24, %s26, %s17
    %p28 = scmp.ge.s32.totalorder %s27, 1
    %s29 = scalar_select %p28, 0, %s27
    %s30 = ssub.s32 %s17, %s29
    %s31 = ssub.s32 %s18, %s25
    %s32 = sor.u32 %s30, %s31
    %p33 = scmp.eq.s32.totalorder %s32, 0
    %s35 = sadd.s32 %s34, 1
    %s36 = scalar_select %p33, %s34, %s35
    %p39 = pneg %p33
    %p40 = scmp.eq.s32.totalorder %s10, 1
    %p41 = por %p39, %p40
    %p42 = scmp.ne.s32.totalorder %s34, %s37
    %p43 = scmp.eq.s32.totalorder %s10, 0
    %p44 = por %p42, %p43
    %p45 = scmp.ne.s32.totalorder %s34, %s37
    %p46 = scmp.eq.s32.totalorder %s15, 1
    %p47 = por %p45, %p46
    %p48 = scmp.ne.s32.totalorder %s37, %s38
    %p49 = scmp.eq.s32.totalorder %s15, 0
    %p50 = por %p48, %p49
    %p51 = scmp.ne.s32.totalorder %s37, %s38
    %p52 = scmp.eq.s32.totalorder %s16, 1
    %p53 = por %p51, %p52
    %p55 = scmp.ne.s32.totalorder %s38, %s54
    %p56 = scmp.eq.s32.totalorder %s16, 0
    %p57 = por %p55, %p56
    %s58 = ssub.s32 %s17, %s29
    %s59 = ssub.s32 %s18, %s25
    %s60 = sor.u32 %s58, %s59
    %p61 = scmp.eq.s32.totalorder %s60, 0
    %s63 = sadd.s32 %s62, 1
    %s64 = scalar_select %p61, %s62, %s63
    %p67 = pneg %p61
    %p68 = scmp.eq.s32.totalorder %s10, 1
    %p69 = por %p67, %p68
    %p70 = scmp.ne.s32.totalorder %s62, %s65
    %p71 = scmp.eq.s32.totalorder %s10, 0
    %p72 = por %p70, %p71
    %p73 = scmp.ne.s32.totalorder %s62, %s65
    %p74 = scmp.eq.s32.totalorder %s15, 1
    %p75 = por %p73, %p74
    %p76 = scmp.ne.s32.totalorder %s65, %s66
    %p77 = scmp.eq.s32.totalorder %s15, 0
    %p78 = por %p76, %p77
    %p79 = scmp.ne.s32.totalorder %s65, %s66
    %p80 = scmp.eq.s32.totalorder %s16, 1
    %p81 = por %p79, %p80
    %p83 = scmp.ne.s32.totalorder %s66, %s82
    %p84 = scmp.eq.s32.totalorder %s16, 0
    %p85 = por %p83, %p84
    %s86 = ssub.s32 %s17, %s29
    %p87 = scmp.eq.s32.totalorder %s86, 0
    %s89 = sadd.s32 %s88, 1
    %s90 = scalar_select %p87, %s88, %s89
    %p93 = pneg %p87
    %p94 = scmp.eq.s32.totalorder %s10, 1
    %p95 = por %p93, %p94
    %p96 = scmp.ne.s32.totalorder %s88, %s91
    %p97 = scmp.eq.s32.totalorder %s10, 0
    %p98 = por %p96, %p97
    %p99 = scmp.ne.s32.totalorder %s88, %s91
    %p100 = scmp.eq.s32.totalorder %s15, 1
    %p101 = por %p99, %p100
    %p102 = scmp.ne.s32.totalorder %s91, %s92
    %p103 = scmp.eq.s32.totalorder %s15, 0
    %p104 = por %p102, %p103
    %p105 = scmp.ne.s32.totalorder %s91, %s92
    %p106 = scmp.eq.s32.totalorder %s16, 1
    %p107 = por %p105, %p106
    %p109 = scmp.ne.s32.totalorder %s92, %s108
    %p110 = scmp.eq.s32.totalorder %s16, 0
    %p111 = por %p109, %p110
    %s113 = sadd.s32 %s112, 1
    %p116 = scmp.eq.s32.totalorder %s10, 1
    %p117 = scmp.ne.s32.totalorder %s112, %s114
    %p118 = scmp.eq.s32.totalorder %s10, 0
    %p119 = por %p117, %p118
    %p120 = scmp.ne.s32.totalorder %s112, %s114
    %p121 = scmp.eq.s32.totalorder %s15, 1
    %p122 = por %p120, %p121
    %p123 = scmp.ne.s32.totalorder %s114, %s115
    %p124 = scmp.eq.s32.totalorder %s15, 0
    %p125 = por %p123, %p124
    %p126 = scmp.ne.s32.totalorder %s114, %s115
    %p127 = scmp.eq.s32.totalorder %s16, 1
    %p128 = por %p126, %p127
    %p130 = scmp.ne.s32.totalorder %s115, %s129
    %p131 = scmp.eq.s32.totalorder %s16, 0
    %p132 = por %p130, %p131
    %s133 = ssub.s32 %s17, %s29
    %p134 = scmp.eq.s32.totalorder %s133, 0
    %s136 = sadd.s32 %s135, 1
    %s137 = scalar_select %p134, %s135, %s136
    %p140 = pneg %p134
    %p141 = scmp.eq.s32.totalorder %s10, 1
    %p142 = por %p140, %p141
    %p143 = scmp.ne.s32.totalorder %s135, %s138
    %p144 = scmp.eq.s32.totalorder %s10, 0
    %p145 = por %p143, %p144
    %p146 = scmp.ne.s32.totalorder %s135, %s138
    %p147 = scmp.eq.s32.totalorder %s15, 1
    %p148 = por %p146, %p147
    %p149 = scmp.ne.s32.totalorder %s138, %s139
    %p150 = scmp.eq.s32.totalorder %s15, 0
    %p151 = por %p149, %p150
    %p152 = scmp.ne.s32.totalorder %s138, %s139
    %p153 = scmp.eq.s32.totalorder %s16, 1
    %p154 = por %p152, %p153
    %p156 = scmp.ne.s32.totalorder %s139, %s155
    %p157 = scmp.eq.s32.totalorder %s16, 0
    %p158 = por %p156, %p157
    %p159 = scmp.le.s32.totalorder 1, %s10
    %p160 = scmp.lt.s32.totalorder %s10, 3
    %p161 = pnand %p159, %p160
    %p162 = pneg %p161
    // Predicated region
    $region9: #{_lambda_.1} parent=5 // pred_check
      _
    $region10: #{_lambda_.1} parent=5 // pred_check_branch
      %164 = sbr.rel (%p161) target = $region12
    $region11: #{_lambda_.1} parent=5 // pred_region
      %s165 = ssub.s32 %s10, 1
      // Predicated region
      $region13: #{_lambda_.1} parent=11 // pred_check
        %p166 = pneg %p104
      $region14: #{_lambda_.1} parent=11 // pred_check_branch
        %168 = sbr.rel (%p166) target = $region16
      $region15: #{_lambda_.1} parent=11 // pred_region
        %p169 = scmp.lt.s32.totalorder %s19, 0
        %s170 = scalar_select %p169, %s19, 0
        %s171 = smul.addr %s170, 8
        %s172 = scalar_lea.vmem %s2, %s171
      $region16: #{_lambda_.1} parent=11 // pred_fallthru
        _
      // Predicated region
      $region17: #{_lambda_.1} parent=11 // pred_check
        %p173 = pneg %p125
      $region18: #{_lambda_.1} parent=11 // pred_check_branch
        %175 = sbr.rel (%p173) target = $region20
      $region19: #{_lambda_.1} parent=11 // pred_region
        _
      $region20: #{_lambda_.1} parent=11 // pred_fallthru
        _
    $region12: #{_lambda_.1} parent=5 // pred_fallthru
      _
    %p176 = scmp.lt.s32.totalorder %s10, 2
    // Predicated region
    $region21: #{_lambda_.1} parent=5 // pred_check
      %p177 = pneg %p176
    $region22: #{_lambda_.1} parent=5 // pred_check_branch
      %179 = sbr.rel (%p177) target = $region24
    $region23: #{_lambda_.1} parent=5 // pred_region
      // Predicated region
      $region25: #{_lambda_.1} parent=23 // pred_check
        %p180 = pneg %p44
      $region26: #{_lambda_.1} parent=23 // pred_check_branch
        %182 = sbr.rel (%p180) target = $region28
      $region27: #{_lambda_.1} parent=23 // pred_region
        %s183 = smul.u32 2, %s18
        %p184 = scmp.lt.s32.totalorder %s17, 0
        %s185 = scalar_select %p184, %s17, 0
        %p186 = scmp.lt.s32.totalorder %s183, 3
        %s187 = scalar_select %p186, %s183, 3
        %s188 = smul.addr %s185, 4
        %s189 = sadd.s32 %s187, %s188
        %s190 = smul.addr %s189, 8
        %s191 = scalar_lea.vmem %s0, %s190
        %s192 = smul.u32 2, %s18
      $region28: #{_lambda_.1} parent=23 // pred_fallthru
        _
      // Predicated region
      $region29: #{_lambda_.1} parent=23 // pred_check
        %p193 = pneg %p72
      $region30: #{_lambda_.1} parent=23 // pred_check_branch
        %195 = sbr.rel (%p193) target = $region32
      $region31: #{_lambda_.1} parent=23 // pred_region
        %s196 = smul.u32 2, %s18
        %p197 = scmp.lt.s32.totalorder %s17, 0
        %s198 = scalar_select %p197, %s17, 0
        %p199 = scmp.lt.s32.totalorder %s196, 3
        %s200 = scalar_select %p199, %s196, 3
        %s201 = smul.addr %s198, 4
        %s202 = sadd.s32 %s200, %s201
        %s203 = smul.addr %s202, 4
        %s204 = scalar_lea.vmem %s1, %s203
        %s205 = smul.u32 2, %s18
      $region32: #{_lambda_.1} parent=23 // pred_fallthru
        _
    $region24: #{_lambda_.1} parent=5 // pred_fallthru
      _
    %p206 = scmp.le.s32.totalorder 1, %s10
    %p207 = scmp.lt.s32.totalorder %s10, 3
    %p208 = pnand %p206, %p207
    %p209 = pneg %p208
    // Predicated region
    $region33: #{_lambda_.1} parent=5 // pred_check
      _
    $region34: #{_lambda_.1} parent=5 // pred_check_branch
      %211 = sbr.rel (%p208) target = $region36
    $region35: #{_lambda_.1} parent=5 // pred_region
      %s212 = ssub.s32 %s10, 1
      %s213 = smul.u32 2, %s20
      %p214 = scmp.lt.s32.totalorder %s19, 0
      %s215 = scalar_select %p214, %s19, 0
      %p216 = scmp.lt.s32.totalorder %s213, 3
      %s217 = scalar_select %p216, %s213, 3
      %s218 = smul.addr %s215, 4
      %s219 = sadd.s32 %s217, %s218
      %s220 = smul.addr %s219, 8
      %s221 = scalar_lea.vmem %s0, %s220
      %p222 = pneg %p50
      %p223 = pneg %p47
      %s224 = smul.u32 2, %s20
      %p225 = scmp.lt.s32.totalorder %s19, 0
      %s226 = scalar_select %p225, %s19, 0
      %p227 = scmp.lt.s32.totalorder %s224, 3
      %s228 = scalar_select %p227, %s224, 3
      %s229 = smul.addr %s226, 4
      %s230 = sadd.s32 %s228, %s229
      %s231 = smul.addr %s230, 4
      %s232 = scalar_lea.vmem %s1, %s231
      %p233 = pneg %p78
      %p234 = pneg %p75
      %p235 = scmp.lt.s32.totalorder %s19, 0
      %s236 = scalar_select %p235, %s19, 0
      %s237 = smul.addr %s236, 8
      %s238 = scalar_lea.vmem %s2, %s237
      %p239 = pneg %p104
      %p240 = pneg %p101
      %p241 = pneg %p125
      %p242 = pneg %p122
      %p243 = pneg %p151
      %p244 = pneg %p148
      %p245 = scmp.lt.s32.totalorder %s19, 0
      %s246 = scalar_select %p245, %s19, 0
      %s247 = smul.addr %s246, 8
      %s248 = scalar_lea.vmem %s4, %s247
      %s249 = smul.u32 2, %s20
      %p250 = scmp.lt.s32.totalorder %s19, 0
      %s251 = scalar_select %p250, %s19, 0
      %p252 = scmp.lt.s32.totalorder %s249, 3
      %s253 = scalar_select %p252, %s249, 3
      %s254 = smul.addr %s251, 4
      %s255 = sadd.s32 %s253, %s254
      %s256 = smul.addr %s255, 8
      %s257 = scalar_lea.vmem %s0, %s256
      %s258 = smul.u32 2, %s20
      %s259 = smul.u32 2, %s20
      %p260 = scmp.lt.s32.totalorder %s19, 0
      %s261 = scalar_select %p260, %s19, 0
      %p262 = scmp.lt.s32.totalorder %s259, 3
      %s263 = scalar_select %p262, %s259, 3
      %s264 = smul.addr %s261, 4
      %s265 = sadd.s32 %s263, %s264
      %s266 = smul.addr %s265, 4
      %s267 = scalar_lea.vmem %s1, %s266
      %s268 = smul.u32 2, %s20
      %p269 = scmp.lt.s32.totalorder %s19, 0
      %s270 = scalar_select %p269, %s19, 0
      %s271 = smul.addr %s270, 8
      %s272 = scalar_lea.vmem %s2, %s271
      %p273 = scmp.lt.s32.totalorder %s19, 0
      %s274 = scalar_select %p273, %s19, 0
      %s275 = smul.addr %s274, 8
      %s276 = scalar_lea.vmem %s4, %s275
      %p277 = scmp.eq.s32.totalorder %s20, 0
      // Predicated region
      $region37: #{_lambda_.1} parent=35 // pred_check
        %p278 = pneg %p277
      $region38: #{_lambda_.1} parent=35 // pred_check_branch
        %280 = sbr.rel (%p278) target = $region40
      $region39: #{_lambda_.1} parent=35 // pred_region
        %281 = vst [vmem:[#allocation2] sm:$0xff] 0.0
        %282 = vst [vmem:[%s276] sm:$0xff] 0.0
      $region40: #{_lambda_.1} parent=35 // pred_fallthru
        _
      %v283 = vld [vmem:[%s257] sm:$0xff]
      %v284 = vld [vmem:[%s257 + $0x8] sm:$0xff]
      %v285 = vld [vmem:[%s267] sm:$0xff]
      %v286 = vld [vmem:[%s272] sm:$0xff]
      %v287 = vld [vmem:[%s3] sm:$0xff]
      %v288 = vld [vmem:[%s3 + $0x8] sm:$0xff]
      %v289 = vld [vmem:[%s3 + $0x10] sm:$0xff]
      %v290 = vld [vmem:[%s3 + $0x18] sm:$0xff]
      %v291 = vld [vmem:[%s3 + $0x20] sm:$0xff]
      %v292 = vld [vmem:[%s3 + $0x28] sm:$0xff]
      %v293 = vld [vmem:[%s3 + $0x30] sm:$0xff]
      %v294 = vld [vmem:[%s3 + $0x38] sm:$0xff]
      %v295 = vld [vmem:[%s3 + $0x40] sm:$0xff]
      %v296 = vld [vmem:[%s3 + $0x48] sm:$0xff]
      %v297 = vld [vmem:[%s3 + $0x50] sm:$0xff]
      %v298 = vld [vmem:[%s3 + $0x58] sm:$0xff]
      %v299 = vld [vmem:[%s3 + $0x60] sm:$0xff]
      %v300 = vld [vmem:[%s3 + $0x68] sm:$0xff]
      %v301 = vld [vmem:[%s3 + $0x70] sm:$0xff]
      %v302 = vld [vmem:[%s3 + $0x78] sm:$0xff]
      %v303 = vld [vmem:[%s3 + $0x80] sm:$0xff]
      %v304 = vld [vmem:[%s3 + $0x88] sm:$0xff]
      %v305 = vld [vmem:[%s3 + $0x90] sm:$0xff]
      %v306 = vld [vmem:[%s3 + $0x98] sm:$0xff]
      %v307 = vld [vmem:[%s3 + $0xa0] sm:$0xff]
      %v308 = vld [vmem:[%s3 + $0xa8] sm:$0xff]
      %v309 = vld [vmem:[%s3 + $0xb0] sm:$0xff]
      %v310 = vld [vmem:[%s3 + $0xb8] sm:$0xff]
      %v311 = vld [vmem:[%s3 + $0xc0] sm:$0xff]
      %v312 = vld [vmem:[%s3 + $0xc8] sm:$0xff]
      %v313 = vld [vmem:[%s3 + $0xd0] sm:$0xff]
      %v314 = vld [vmem:[%s3 + $0xd8] sm:$0xff]
      %v315 = vld [vmem:[%s3 + $0xe0] sm:$0xff]
      %v316 = vld [vmem:[%s3 + $0xe8] sm:$0xff]
      %v317 = vld [vmem:[%s3 + $0xf0] sm:$0xff]
      %v318 = vld [vmem:[%s3 + $0xf8] sm:$0xff]
      %v320 = vunpack.c.l.b16 %v285
      %v321 = vunpack.c.h.b16 %v285
      %v322 = vpack.c.b16 %v320, %v320
      %v323 = vpack.c.b16 %v321, %v321
      %v358 = vunpack.c.l.b16 %v287
      %v359 = vunpack.c.h.b16 %v287
      %v360 = vunpack.c.l.b16 %v288
      %v361 = vunpack.c.h.b16 %v288
      %v362 = vunpack.c.l.b16 %v289
      %v363 = vunpack.c.h.b16 %v289
      %v364 = vunpack.c.l.b16 %v290
      %v365 = vunpack.c.h.b16 %v290
      %v366 = vunpack.c.l.b16 %v291
      %v367 = vunpack.c.h.b16 %v291
      %v368 = vunpack.c.l.b16 %v292
      %v369 = vunpack.c.h.b16 %v292
      %v370 = vunpack.c.l.b16 %v293
      %v371 = vunpack.c.h.b16 %v293
      %v372 = vunpack.c.l.b16 %v294
      %v373 = vunpack.c.h.b16 %v294
      %v374 = vunpack.c.l.b16 %v295
      %v375 = vunpack.c.h.b16 %v295
      %v376 = vunpack.c.l.b16 %v296
      %v377 = vunpack.c.h.b16 %v296
      %v378 = vunpack.c.l.b16 %v297
      %v379 = vunpack.c.h.b16 %v297
      %v380 = vunpack.c.l.b16 %v298
      %v381 = vunpack.c.h.b16 %v298
      %v382 = vunpack.c.l.b16 %v299
      %v383 = vunpack.c.h.b16 %v299
      %v384 = vunpack.c.l.b16 %v300
      %v385 = vunpack.c.h.b16 %v300
      %v386 = vunpack.c.l.b16 %v301
      %v387 = vunpack.c.h.b16 %v301
      %v388 = vunpack.c.l.b16 %v302
      %v389 = vunpack.c.h.b16 %v302
      %v390 = vunpack.c.l.b16 %v303
      %v391 = vunpack.c.h.b16 %v303
      %v392 = vunpack.c.l.b16 %v304
      %v393 = vunpack.c.h.b16 %v304
      %v394 = vunpack.c.l.b16 %v305
      %v395 = vunpack.c.h.b16 %v305
      %v396 = vunpack.c.l.b16 %v306
      %v397 = vunpack.c.h.b16 %v306
      %v398 = vunpack.c.l.b16 %v307
      %v399 = vunpack.c.h.b16 %v307
      %v400 = vunpack.c.l.b16 %v308
      %v401 = vunpack.c.h.b16 %v308
      %v402 = vunpack.c.l.b16 %v309
      %v403 = vunpack.c.h.b16 %v309
      %v404 = vunpack.c.l.b16 %v310
      %v405 = vunpack.c.h.b16 %v310
      %v406 = vunpack.c.l.b16 %v311
      %v407 = vunpack.c.h.b16 %v311
      %v408 = vunpack.c.l.b16 %v312
      %v409 = vunpack.c.h.b16 %v312
      %v410 = vunpack.c.l.b16 %v313
      %v411 = vunpack.c.h.b16 %v313
      %v412 = vunpack.c.l.b16 %v314
      %v413 = vunpack.c.h.b16 %v314
      %v414 = vunpack.c.l.b16 %v315
      %v415 = vunpack.c.h.b16 %v315
      %v416 = vunpack.c.l.b16 %v316
      %v417 = vunpack.c.h.b16 %v316
      %v418 = vunpack.c.l.b16 %v317
      %v419 = vunpack.c.h.b16 %v317
      %v420 = vunpack.c.l.b16 %v318
      %v421 = vunpack.c.h.b16 %v318
      %v422 = vpack.c.b16 %v360, %v358
      %v423 = vpack.c.b16 %v361, %v359
      %v424 = vpack.c.b16 %v364, %v362
      %v425 = vpack.c.b16 %v365, %v363
      %v426 = vpack.c.b16 %v368, %v366
      %v427 = vpack.c.b16 %v369, %v367
      %v428 = vpack.c.b16 %v372, %v370
      %v429 = vpack.c.b16 %v373, %v371
      %v430 = vpack.c.b16 %v376, %v374
      %v431 = vpack.c.b16 %v377, %v375
      %v432 = vpack.c.b16 %v380, %v378
      %v433 = vpack.c.b16 %v381, %v379
      %v434 = vpack.c.b16 %v384, %v382
      %v435 = vpack.c.b16 %v385, %v383
      %v436 = vpack.c.b16 %v388, %v386
      %v437 = vpack.c.b16 %v389, %v387
      %v438 = vpack.c.b16 %v392, %v390
      %v439 = vpack.c.b16 %v393, %v391
      %v440 = vpack.c.b16 %v396, %v394
      %v441 = vpack.c.b16 %v397, %v395
      %v442 = vpack.c.b16 %v400, %v398
      %v443 = vpack.c.b16 %v401, %v399
      %v444 = vpack.c.b16 %v404, %v402
      %v445 = vpack.c.b16 %v405, %v403
      %v446 = vpack.c.b16 %v408, %v406
      %v447 = vpack.c.b16 %v409, %v407
      %v448 = vpack.c.b16 %v412, %v410
      %v449 = vpack.c.b16 %v413, %v411
      %v450 = vpack.c.b16 %v416, %v414
      %v451 = vpack.c.b16 %v417, %v415
      %v452 = vpack.c.b16 %v420, %v418
      %v453 = vpack.c.b16 %v421, %v419
      %486 = vmatprep.subr.bf16.mxu0 %v423
      %487 = vmatpush1.bf16.msra.mxu0 %v422
      %488 = vmatprep.subr.bf16.mxu0 %v425
      %489 = vmatpush1.bf16.msra.mxu0 %v424
      %490 = vmatprep.subr.bf16.mxu0 %v427
      %491 = vmatpush1.bf16.msra.mxu0 %v426
      %492 = vmatprep.subr.bf16.mxu0 %v429
      %493 = vmatpush1.bf16.msra.mxu0 %v428
      %494 = vmatprep.subr.bf16.mxu0 %v431
      %495 = vmatpush1.bf16.msra.mxu0 %v430
      %496 = vmatprep.subr.bf16.mxu0 %v433
      %497 = vmatpush1.bf16.msra.mxu0 %v432
      %498 = vmatprep.subr.bf16.mxu0 %v435
      %499 = vmatpush1.bf16.msra.mxu0 %v434
      %500 = vmatprep.subr.bf16.mxu0 %v437
      %501 = vmatpush1.bf16.msra.mxu0 %v436
      %502 = vmatprep.subr.bf16.mxu0 %v439
      %503 = vmatpush1.bf16.msra.mxu0 %v438
      %504 = vmatprep.subr.bf16.mxu0 %v441
      %505 = vmatpush1.bf16.msra.mxu0 %v440
      %506 = vmatprep.subr.bf16.mxu0 %v443
      %507 = vmatpush1.bf16.msra.mxu0 %v442
      %508 = vmatprep.subr.bf16.mxu0 %v445
      %509 = vmatpush1.bf16.msra.mxu0 %v444
      %510 = vmatprep.subr.bf16.mxu0 %v447
      %511 = vmatpush1.bf16.msra.mxu0 %v446
      %512 = vmatprep.subr.bf16.mxu0 %v449
      %513 = vmatpush1.bf16.msra.mxu0 %v448
      %514 = vmatprep.subr.bf16.mxu0 %v451
      %515 = vmatpush1.bf16.msra.mxu0 %v450
      %516 = vmatprep.subr.bf16.mxu0 %v453
      %517 = vmatpush1.bf16.msra.mxu0 %v452
      %518 = vmatprep.mubr.bf16.mxu0 %v323
      %519 = vmatmul.mubr.bf16.gmra.mrb[0].mxu0 %v322
      %v520 = vpop.f32.mrb[0].mxu0
      %v521 = vadd.f32 0.0, %v520
      %v522 = vpop.f32.mrb[0].mxu0
      %v523 = vadd.f32 0.0, %v522
      %v524 = vpop.f32.mrb[0].mxu0
      %v525 = vpop.f32.mrb[0].mxu0
      %526 = vdwg.mxu0
      %v527 = vld [vmem:[#allocation2] sm:$0xff]
      %529 = vset.pattern.permute.xlu0 0
      %530 = vperm.xlu0 %529, %v527
      %v531 = vpop.permute.xlu0 %530
      %v533 = vadd.f32 %v531, %v521
      %v534 = vadd.f32 %v531, %v523
      %v535 = vlaneseq
      %v536 = vand.u32 %v535, 127
      %v537 = vadd.s32 %v536, 128
      %v538 = vadd.s32 %v536, 1
      %v539 = vadd.s32 %v537, 1
      %s540 = smul.u32 %s20, 256
      %v541 = vstv %s540
      %v542 = vadd.s32 %v538, %v541
      %v543 = vadd.s32 %v539, %v541
      %v544 = vcvt.s32.f32 %v542
      %v545 = vcvt.s32.f32 %v543
      %547 = vset.pattern.permute.xlu0 0
      %548 = vperm.xlu0 %547, %v286
      %v549 = vpop.permute.xlu0 %548
      %v551 = vsub.f32 %v549, %v533
      %v552 = vsub.f32 %v549, %v534
      %v553 = vadd.f32 %v549, %v544
      %v554 = vadd.f32 %v549, %v545
      %v555 = vsub.f32 %v553, %v533
      %v556 = vsub.f32 %v554, %v534
      %v557 = vrcp.pop %v555
      %v558 = vmul.f32 %v551, %v557
      %v559 = vrcp.pop %v556
      %v560 = vmul.f32 %v552, %v559
      %v561 = vsub.f32 1.0, %v558
      %v562 = vsub.f32 1.0, %v560
      %563 = vrot.lane.b32.xlu0 %v561, 1
      %v564 = vpop.permute.xlu0 %563
      %565 = vrot.lane.b32.xlu0 %v562, 1
      %v566 = vpop.permute.xlu0 %565
      %vm567 = vcmp.lt.s32.totalorder %v536, 1
      %v568 = vsel %vm567, %v564, %v566
      %v569 = vsel %vm567, %v566, %v564
      %vm570 = vcmp.eq.s32.totalorder %v536, 0
      %vm571 = vcmp.eq.s32.totalorder %v537, 0
      %572 = vset.pattern.permute.xlu0 1
      %573 = vperm.xlu0 %572, %v527
      %v574 = vpop.permute.xlu0 %573
      %v576 = vsel %vm570, %v574, %v569
      %v577 = vsel %vm571, %v574, %v568
      %v578 = vsub.f32 %v561, %v576
      %v579 = vsub.f32 %v562, %v577
      %vm580 = vcmp.gt.f32.partialorder %v283, 0.0
      %vm581 = vcmp.gt.f32.partialorder %v284, 0.0
      %v582 = vadd.f32 %v283, 1.0
      %v583 = vadd.f32 %v284, 1.0
      %v584 = vmin.f32 %v283, 0.0
      %v585 = vmin.f32 %v284, 0.0
      %v586 = vmul.f32 %v584, 1.442695
      %v587 = vpow.pop %v586
      %v588 = vmul.f32 %v585, 1.442695
      %v589 = vpow.pop %v588
      %v590 = vsel %vm580, %v582, %v587
      %v591 = vsel %vm581, %v583, %v589
      %v592 = vmul.f32 %v590, %v578
      %v593 = vmul.f32 %v591, %v579
      %v594 = vadd.f32 %v592, %v593
      %v595 = vld [vmem:[%s276] sm:$0xff]
      %v596 = vadd.f32 %v595, %v594
      %597 = vst [vmem:[%s276] sm:$0xff] %v596
      %599 = vrot.lane.b32.xlu0 %v534, 1
      %v600 = vpop.permute.xlu0 %599
      %vm602 = vcmask 7168
      %603 = vst.msk [vmem:[#allocation2] sm:$0xff] %vm602, %v600
      %605 = vrot.lane.b32.xlu0 %v562, 2
      %v606 = vpop.permute.xlu0 %605
      %vm608 = vcmask 15368
      %609 = vst.msk [vmem:[#allocation2] sm:$0xff] %vm608, %v606
      %p610 = scmp.lt.s32.totalorder %s19, 0
      %s611 = scalar_select %p610, %s19, 0
      %s612 = smul.addr %s611, 8
      %s613 = scalar_lea.vmem %s4, %s612
      // Predicated region
      $region41: #{_lambda_.1} parent=35 // pred_check
        %p614 = pneg %p148
      $region42: #{_lambda_.1} parent=35 // pred_check_branch
        %616 = sbr.rel (%p614) target = $region44
      $region43: #{_lambda_.1} parent=35 // pred_region
        _
      $region44: #{_lambda_.1} parent=35 // pred_fallthru
        _
      // Predicated region
      $region45: #{_lambda_.1} parent=35 // pred_check
        %p617 = pneg %p148
      $region46: #{_lambda_.1} parent=35 // pred_check_branch
        %619 = sbr.rel (%p617) target = $region48
      $region47: #{_lambda_.1} parent=35 // pred_region
        %p620 = scmp.lt.s32.totalorder %s19, 0
        %s621 = scalar_select %p620, %s19, 0
        %s622 = smul.addr %s621, 8
        %s623 = scalar_lea.vmem %s4, %s622
      $region48: #{_lambda_.1} parent=35 // pred_fallthru
        _
    $region36: #{_lambda_.1} parent=5 // pred_fallthru
      _
    %p624 = scmp.le.s32.totalorder 2, %s10
    // Predicated region
    $region49: #{_lambda_.1} parent=5 // pred_check
      %p625 = pneg %p624
    $region50: #{_lambda_.1} parent=5 // pred_check_branch
      %627 = sbr.rel (%p625) target = $region52
    $region51: #{_lambda_.1} parent=5 // pred_region
      %s628 = ssub.s32 %s10, 2
    $region52: #{_lambda_.1} parent=5 // pred_fallthru
      _
  $region6: #{_lambda_.1} parent=0 // loop_footer
    %s14 = sadd.s32 1, %s10
  $region7: #{_lambda_.1} parent=0 // loop_footer_branch
    %9 = sbr.rel target = $region3
  $region8: #{_lambda_.1} parent=0 // loop_exit
    _

</llo_original>
